<compile_context>
chip_gen: v7x
topology: tpu7x:2x2x1
jax: 0.10.0
libtpu: 0.0.40
codegen_flags: <defaults>
</compile_context>

<pallas_src>
import functools

import jax
import jax.numpy as jnp
from jax import lax
from jax.experimental import pallas as pl
from jax.experimental.pallas import tpu as pltpu


# ---------------------------------------------------------------------------
# Generic fused linear kernel:  o = x @ W + b
# ---------------------------------------------------------------------------
def _linear_kernel(x_ref, w_ref, b_ref, o_ref):
    acc = jnp.dot(x_ref[...], w_ref[...], preferred_element_type=jnp.float32)
    o_ref[...] = (acc + b_ref[...]).astype(o_ref.dtype)


def _pick_block(n, target):
    """Largest tile <= target that divides n (power-of-two sweep), else n."""
    if n <= target:
        return n
    b = target
    while b >= 8:
        if n % b == 0:
            return b
        b //= 2
    return n


def _linear(x2, w, b, out_dtype, *, row_block, vmem_limit_bytes):
    rows, d_in = x2.shape
    d_out = w.shape[1]
    assert rows % row_block == 0
    return pl.pallas_call(
        _linear_kernel,
        out_shape=jax.ShapeDtypeStruct((rows, d_out), out_dtype),
        grid=(rows // row_block,),
        in_specs=[
            pl.BlockSpec((row_block, d_in), lambda i: (i, 0)),
            pl.BlockSpec((d_in, d_out), lambda i: (0, 0)),
            pl.BlockSpec((1, d_out), lambda i: (0, 0)),
        ],
        out_specs=pl.BlockSpec((row_block, d_out), lambda i: (i, 0)),
        compiler_params=pltpu.CompilerParams(
            dimension_semantics=("parallel",),
            vmem_limit_bytes=vmem_limit_bytes),
    )(x2, w, b)


# ---------------------------------------------------------------------------
# Flash-style attention kernel.
# grid = (B, n_head, num_q_tiles, num_kv_tiles); kv is the reduction axis.
# ---------------------------------------------------------------------------
def _flash_attn_kernel(q_ref, k_ref, v_ref, bias_ref, o_ref,
                       m_sc, l_sc, acc_sc, *, scale):
    ki = pl.program_id(3)

    @pl.when(ki == 0)
    def _():
        # Large-finite init (not -inf) so fully-masked kv tiles don't NaN.
        m_sc[...] = jnp.full_like(m_sc, -1e30)
        l_sc[...] = jnp.zeros_like(l_sc)
        acc_sc[...] = jnp.zeros_like(acc_sc)

    q = q_ref[0, 0] * scale          # [tq, d_key]  (matches torch scaled_q)
    k = k_ref[0, 0]                  # [tk, d_key]
    v = v_ref[0, 0]                  # [tk, d_value]

    # NT-form contraction of the shared last dim (no explicit k transpose).
    s = lax.dot_general(q, k, dimension_numbers=(((1,), (1,)), ((), ())),
                        preferred_element_type=jnp.float32)       # [tq, tk]
    s = s + bias_ref[0, 0].astype(jnp.float32)

    m_prev = m_sc[...]
    m_new = jnp.maximum(m_prev, jnp.max(s, axis=-1, keepdims=True))
    alpha = jnp.exp(m_prev - m_new)
    p = jnp.exp(s - m_new)                                        # f32

    l_sc[...] = alpha * l_sc[...] + jnp.sum(p, axis=-1, keepdims=True)
    acc_sc[...] = alpha * acc_sc[...] + jnp.dot(
        p.astype(v.dtype), v, preferred_element_type=jnp.float32)
    m_sc[...] = m_new

    @pl.when(ki == pl.num_programs(3) - 1)
    def _():
        # Exact reciprocal for tight parity with the PyTorch reference.
        inv_l = pl.reciprocal(l_sc[...], approx=False)
        out = acc_sc[...] * inv_l                                 # [tq, d_value]
        o_ref[...] = out[None, None].astype(o_ref.dtype)


def _attention(qh, kh, vh, attn_bias, *, d_key, q_block, kv_block,
               out_dtype, vmem_limit_bytes):
    B, H, Mq, Dk = qh.shape
    Mk = kh.shape[2]
    Dv = vh.shape[3]

    tq = _pick_block(Mq, q_block)
    tk = _pick_block(Mk, kv_block)
    grid = (B, H, Mq // tq, Mk // tk)

    kernel = functools.partial(_flash_attn_kernel, scale=d_key ** -0.5)

    return pl.pallas_call(
        kernel,
        out_shape=jax.ShapeDtypeStruct((B, H, Mq, Dv), out_dtype),
        grid=grid,
        in_specs=[
            pl.BlockSpec((1, 1, tq, Dk), lambda b, h, qi, ki: (b, h, qi, 0)),
            pl.BlockSpec((1, 1, tk, Dk), lambda b, h, qi, ki: (b, h, ki, 0)),
            pl.BlockSpec((1, 1, tk, Dv), lambda b, h, qi, ki: (b, h, ki, 0)),
            pl.BlockSpec((1, 1, tq, tk), lambda b, h, qi, ki: (b, h, qi, ki)),
        ],
        out_specs=pl.BlockSpec((1, 1, tq, Dv), lambda b, h, qi, ki: (b, h, qi, 0)),
        scratch_shapes=[
            pltpu.VMEM((tq, 1), jnp.float32),     # running max
            pltpu.VMEM((tq, 1), jnp.float32),     # running denom
            pltpu.VMEM((tq, Dv), jnp.float32),    # running numerator
        ],
        compiler_params=pltpu.CompilerParams(
            dimension_semantics=("parallel", "parallel", "parallel", "arbitrary"),
            vmem_limit_bytes=vmem_limit_bytes),
    )(qh, kh, vh, attn_bias)


# ---------------------------------------------------------------------------
# Full forward pass matching multi_head_attention.forward
# ---------------------------------------------------------------------------
def multi_head_attention_forward(queries, keys, values, attn_bias, params, *,
                                 n_head, d_key, d_value,
                                 matmul_dtype=jnp.float32,
                                 q_block=256, kv_block=256, row_block=512,
                                 vmem_limit_bytes=32 * 1024 * 1024):
    # Module semantics: keys/values default to queries/keys.
    keys = queries if keys is None else keys
    values = keys if values is None else values

    B, Mq, d_model = queries.shape
    Mk = keys.shape[1]
    hk = d_key * n_head
    hv = d_value * n_head
    # output_linear expects d_key*n_head inputs while heads combine to hv.
    assert hk == hv, "module requires d_key*n_head == d_value*n_head"

    out_dtype = queries.dtype
    mdt = matmul_dtype
    rows_q = B * Mq
    rows_k = B * Mk
    rbq = _pick_block(rows_q, row_block)
    rbk = _pick_block(rows_k, row_block)

    # ---- Q/K/V projections ("cast once": operands & weights in matmul_dtype,
    #      bias add + accumulation in f32, results stored in matmul_dtype) ----
    xq = queries.reshape(rows_q, d_model).astype(mdt)
    wq = params["wq"].astype(mdt)
    wk = params["wk"].astype(mdt)
    wv = params["wv"].astype(mdt)
    bq = params["bq"].astype(jnp.float32)
    bk = params["bk"].astype(jnp.float32)
    bv = params["bv"].astype(jnp.float32)

    if (keys is queries) and (values is keys):
        # Self-attention: single fused [rows, d_model] @ [d_model, 3*hk].
        w_qkv = jnp.concatenate([wq, wk, wv], axis=1)
        b_qkv = jnp.concatenate([bq, bk, bv], axis=1)
        qkv = _linear(xq, w_qkv, b_qkv, mdt,
                      row_block=rbq, vmem_limit_bytes=vmem_limit_bytes)
        q2, k2, v2 = qkv[:, :hk], qkv[:, hk:2 * hk], qkv[:, 2 * hk:]
    elif values is keys:
        # K/V share an input: fuse those two projections.
        q2 = _linear(xq, wq, bq, mdt,
                     row_block=rbq, vmem_limit_bytes=vmem_limit_bytes)
        xk = keys.reshape(rows_k, d_model).astype(mdt)
        w_kv = jnp.concatenate([wk, wv], axis=1)
        b_kv = jnp.concatenate([bk, bv], axis=1)
        kv = _linear(xk, w_kv, b_kv, mdt,
                     row_block=rbk, vmem_limit_bytes=vmem_limit_bytes)
        k2, v2 = kv[:, :hk], kv[:, hk:]
    else:
        q2 = _linear(xq, wq, bq, mdt,
                     row_block=rbq, vmem_limit_bytes=vmem_limit_bytes)
        xk = keys.reshape(rows_k, d_model).astype(mdt)
        xv = values.reshape(rows_k, d_model).astype(mdt)
        k2 = _linear(xk, wk, bk, mdt,
                     row_block=rbk, vmem_limit_bytes=vmem_limit_bytes)
        v2 = _linear(xv, wv, bv, mdt,
                     row_block=rbk, vmem_limit_bytes=vmem_limit_bytes)

    # ---- split heads (wrapper-level layout plumbing) ----
    qh = q2.reshape(B, Mq, n_head, d_key).transpose(0, 2, 1, 3)
    kh = k2.reshape(B, Mk, n_head, d_key).transpose(0, 2, 1, 3)
    vh = v2.reshape(B, Mk, n_head, d_value).transpose(0, 2, 1, 3)

    if attn_bias is None:
        attn_bias = jnp.zeros((B, n_head, Mq, Mk), jnp.float32)

    # ---- flash-style scaled dot-product attention ----
    ctx = _attention(qh, kh, vh, attn_bias, d_key=d_key,
                     q_block=q_block, kv_block=kv_block,
                     out_dtype=mdt, vmem_limit_bytes=vmem_limit_bytes)

    # ---- combine heads + output projection ----
    ctx2 = ctx.transpose(0, 2, 1, 3).reshape(rows_q, hv)
    wo = params["wo"].astype(mdt)
    bo = params["bo"].astype(jnp.float32)
    out = _linear(ctx2, wo, bo, out_dtype,
                  row_block=rbq, vmem_limit_bytes=vmem_limit_bytes)
    return out.reshape(B, Mq, d_model)


# ---------------------------------------------------------------------------
# Plain-JAX reference matching the PyTorch forward exactly.
# ---------------------------------------------------------------------------
def mha_reference(queries, keys, values, attn_bias, params,
                  *, n_head, d_key, d_value):
    keys = queries if keys is None else keys
    values = keys if values is None else values
    B, Mq, _ = queries.shape
    Mk = keys.shape[1]
    q = queries @ params["wq"] + params["bq"][0]
    k = keys @ params["wk"] + params["bk"][0]
    v = values @ params["wv"] + params["bv"][0]

    def split(x, M, h):
        return x.reshape(B, M, n_head, h).transpose(0, 2, 1, 3)

    q = split(q, Mq, d_key)
    k = split(k, Mk, d_key)
    v = split(v, Mk, d_value)

    scores = (q * d_key ** (-0.5)) @ jnp.swapaxes(k, -1, -2)
    if attn_bias is not None:
        scores = scores + attn_bias
    w = jax.nn.softmax(scores, axis=-1)
    ctx = w @ v
    out = ctx.transpose(0, 2, 1, 3).reshape(B, Mq, n_head * d_value)
    return out @ params["wo"] + params["bo"][0]


if __name__ == "__main__":
    B, M = 2, 8
    d_model = 32
    n_head = 2
    d_key = d_value = 16   # output_linear requires d_key*n_head == d_value*n_head

    key = jax.random.PRNGKey(0)
    ks = jax.random.split(key, 12)

    hk = d_key * n_head
    hv = d_value * n_head
    params = {
        "wq": 0.05 * jax.random.normal(ks[0], (d_model, hk), jnp.float32),
        "bq": 0.05 * jax.random.normal(ks[1], (1, hk), jnp.float32),
        "wk": 0.05 * jax.random.normal(ks[2], (d_model, hk), jnp.float32),
        "bk": 0.05 * jax.random.normal(ks[3], (1, hk), jnp.float32),
        "wv": 0.05 * jax.random.normal(ks[4], (d_model, hv), jnp.float32),
        "bv": 0.05 * jax.random.normal(ks[5], (1, hv), jnp.float32),
        "wo": 0.05 * jax.random.normal(ks[6], (hv, d_model), jnp.float32),
        "bo": 0.05 * jax.random.normal(ks[7], (1, d_model), jnp.float32),
    }

    queries = jax.random.normal(ks[8], (B, M, d_model), jnp.float32)
    keys_in = jax.random.normal(ks[9], (B, M, d_model), jnp.float32)
    values_in = jax.random.normal(ks[10], (B, M, d_model), jnp.float32)
    attn_bias = 0.1 * jax.random.normal(ks[11], (B, n_head, M, M), jnp.float32)

    # 1) Self-attention (keys=None, values=None): exercises fused QKV path.
    out_self = multi_head_attention_forward(
        queries, None, None, attn_bias, params,
        n_head=n_head, d_key=d_key, d_value=d_value)
    out_self = jax.block_until_ready(out_self)
    ref_self = mha_reference(queries, None, None, attn_bias, params,
                             n_head=n_head, d_key=d_key, d_value=d_value)
    assert out_self.shape == (B, M, d_model)
    assert jnp.allclose(out_self, ref_self, atol=1e-4, rtol=1e-4), \
        f"self-attn mismatch: max abs err = {jnp.max(jnp.abs(out_self - ref_self))}"

    # 2) Cross attention (distinct q/k/v): exercises separate-projection path.
    out_x = multi_head_attention_forward(
        queries, keys_in, values_in, attn_bias, params,
        n_head=n_head, d_key=d_key, d_value=d_value)
    out_x = jax.block_until_ready(out_x)
    ref_x = mha_reference(queries, keys_in, values_in, attn_bias, params,
                          n_head=n_head, d_key=d_key, d_value=d_value)
    assert out_x.shape == (B, M, d_model)
    assert jnp.allclose(out_x, ref_x, atol=1e-4, rtol=1e-4), \
        f"cross-attn mismatch: max abs err = {jnp.max(jnp.abs(out_x - ref_x))}"

    print("KERNEL_OK")
</pallas_src>

<mosaic_0001>
module attributes {stable_mosaic.version = 11 : i64} {
  func.func @_linear_kernel(%arg0: i32, %arg1: memref<16x32xf32, #tpu.memory_space<vmem>>, %arg2: memref<32x96xf32, #tpu.memory_space<vmem>>, %arg3: memref<1x96xf32, #tpu.memory_space<vmem>>, %arg4: memref<16x96xf32, #tpu.memory_space<vmem>>) attributes {dimension_semantics = [#tpu.dimension_semantics<parallel>], iteration_bounds = array<i64: 1>, scalar_prefetch = 0 : i64, scratch_operands = 0 : i64, tpu.core_type = #tpu.core_type<tc>, window_params = [{transform_indices = @transform_0, window_bounds = array<i64: 16, 32>}, {pipeline_mode = #tpu.pipeline_mode<synchronous>, transform_indices = @transform_1, window_bounds = array<i64: 32, 96>}, {pipeline_mode = #tpu.pipeline_mode<synchronous>, transform_indices = @transform_2, window_bounds = array<i64: 1, 96>}, {transform_indices = @transform_3, window_bounds = array<i64: 16, 96>}]} {
    %c0 = arith.constant 0 : index
    %c0_0 = arith.constant 0 : index
    %0 = vector.load %arg1[%c0, %c0_0] : memref<16x32xf32, #tpu.memory_space<vmem>>, vector<16x32xf32>
    %c0_1 = arith.constant 0 : index
    %c0_2 = arith.constant 0 : index
    %1 = vector.load %arg2[%c0_1, %c0_2] : memref<32x96xf32, #tpu.memory_space<vmem>>, vector<32x96xf32>
    %cst = arith.constant dense<0.000000e+00> : vector<16x96xf32>
    %2 = tpu.matmul %0, %1, %cst {dimension_numbers = #tpu.dot_dimension_numbers<[1], [0], [0], [1], [0, 0, 1, 1], [], []>} : vector<16x32xf32>, vector<32x96xf32>, vector<16x96xf32> -> vector<16x96xf32>
    %c0_3 = arith.constant 0 : index
    %c0_4 = arith.constant 0 : index
    %3 = vector.load %arg3[%c0_3, %c0_4] : memref<1x96xf32, #tpu.memory_space<vmem>>, vector<1x96xf32>
    %4 = vector.broadcast %3 : vector<1x96xf32> to vector<16x96xf32>
    %5 = arith.addf %2, %4 : vector<16x96xf32>
    %c0_5 = arith.constant 0 : index
    %c0_6 = arith.constant 0 : index
    %6 = vector.load %arg4[%c0_5, %c0_6] : memref<16x96xf32, #tpu.memory_space<vmem>>, vector<16x96xf32>
    tpu.vector_store %arg4[%c0_5, %c0_6], %5 {strides = array<i32>} : memref<16x96xf32, #tpu.memory_space<vmem>>, vector<16x96xf32>,
    return
  }
  func.func @transform_0(%arg0: i32) -> (i32, i32) {
    %c0_i32 = arith.constant 0 : i32
    %c0_i32_0 = arith.constant 0 : i32
    return %arg0, %c0_i32 : i32, i32
  }
  func.func @transform_1(%arg0: i32) -> (i32, i32) {
    %c0_i32 = arith.constant 0 : i32
    %c0_i32_0 = arith.constant 0 : i32
    %c0_i32_1 = arith.constant 0 : i32
    return %c0_i32, %c0_i32_0 : i32, i32
  }
  func.func @transform_2(%arg0: i32) -> (i32, i32) {
    %c0_i32 = arith.constant 0 : i32
    %c0_i32_0 = arith.constant 0 : i32
    %c0_i32_1 = arith.constant 0 : i32
    return %c0_i32, %c0_i32_0 : i32, i32
  }
  func.func @transform_3(%arg0: i32) -> (i32, i32) {
    %c0_i32 = arith.constant 0 : i32
    %c0_i32_0 = arith.constant 0 : i32
    return %arg0, %c0_i32 : i32, i32
  }
}

</mosaic_0001>

<llo_original>
// kernel: tpu_custom_call.1
$region0: #{tpu_custom_call.1}
  #allocation0 [shape = 'u32[]', space=smem, size = 0x4, offset = 0x4, fixed_abs, tag = 'smem constant byte address 0x4 - core index']
  #allocation1 [shape = 'u32[144,128]{1,0:T(1,128)}', space=vmem, size = 0x12000, scoped, tag = 'internal scratch']
  %s0 = inlined_call_operand.hbm [shape: f32[16,32], index: 0, kind: input, shape index: {}]
  %s1 = inlined_call_operand.hbm [shape: f32[32,96], index: 1, kind: input, shape index: {}]
  %s2 = inlined_call_operand.vmem [shape: f32[1,96], index: 2, kind: input, shape index: {}]
  %s3 = inlined_call_operand.hbm [shape: f32[16,96], index: 3, kind: output, shape index: {}]
  %s4 = sld [smem:[#allocation0]]
  $region30: #{tpu_custom_call.1} parent=0
    _
  %s6 = ssub.s32 1, %s4
  %s7 = scalar_select 0, %s6, %s4
  $region1: #{tpu_custom_call.1} parent=0
    #allocation2 [shape = 'u8[8192]{0}', space=vmem, size = 0x2000, scoped, tag = 'input window, operand 0, single buffered']
    #allocation3 [shape = 's32[1]{0}', space=sflag, size = 0x4, scoped, tag = 'scoped memory for tpu_custom_call.1']
    #allocation4 [shape = 's32[1]{0}', space=sflag, size = 0x4, scoped, tag = 'scoped memory for tpu_custom_call.1']
    #allocation5 [shape = 'u8[16384]{0}', space=vmem, size = 0x4000, scoped, tag = 'input window, operand 1, single buffered']
    #allocation6 [shape = 's32[1]{0}', space=sflag, size = 0x4, scoped, tag = 'scoped memory for tpu_custom_call.1']
    #allocation7 [shape = 'u8[8192]{0}', space=vmem, size = 0x2000, scoped, tag = 'output window, operand 0, single buffered']
    %8 = vsyncpa [#allocation3], 0
    %9 = vsyncpa [#allocation6], 0
    %10 = vsyncpa [#allocation4], 0
    // Predicated region
    $region2: #{tpu_custom_call.1} parent=1 // pred_check
      _
    $region3: #{tpu_custom_call.1} parent=1 // pred_check_branch
      %12 = sbr.rel (0) target = $region5
    $region4: #{tpu_custom_call.1} parent=1 // pred_region
      %s14 = ssub.s32 256, 256
      %15 = vsyncadd [#allocation3], %s14
      %s16 = sshll.u32 [#allocation2], 4
      %s17 = int_to_ptr.vmem [resolvable:$true] %s16
      %22 = dma.hbm_to_vmem [thread:$0]  %s0, 256, %s17, [#allocation3], 128, 128, 8
    $region5: #{tpu_custom_call.1} parent=1 // pred_fallthru
      _
    // Predicated region
    $region6: #{tpu_custom_call.1} parent=1 // pred_check
      _
    $region7: #{tpu_custom_call.1} parent=1 // pred_check_branch
      %24 = sbr.rel (0) target = $region9
    $region8: #{tpu_custom_call.1} parent=1 // pred_region
      %s26 = ssub.s32 512, 512
      %27 = vsyncadd [#allocation6], %s26
      %s28 = sshll.u32 [#allocation5], 4
      %s29 = int_to_ptr.vmem [resolvable:$true] %s28
      %34 = dma.hbm_to_vmem [thread:$0]  %s1, 512, %s29, [#allocation6], 128, 128, 8
    $region9: #{tpu_custom_call.1} parent=1 // pred_fallthru
      _
    // Predicated region
    $region10: #{tpu_custom_call.1} parent=1 // pred_check
      _
    $region11: #{tpu_custom_call.1} parent=1 // pred_check_branch
      %36 = sbr.rel (0) target = $region13
    $region12: #{tpu_custom_call.1} parent=1 // pred_region
      _
    $region13: #{tpu_custom_call.1} parent=1 // pred_fallthru
      _
    // Predicated region
    $region14: #{tpu_custom_call.1} parent=1 // pred_check
      _
    $region15: #{tpu_custom_call.1} parent=1 // pred_check_branch
      %38 = sbr.rel (0) target = $region17
    $region16: #{tpu_custom_call.1} parent=1 // pred_region
      %39 = dma.done [#allocation3], 256
    $region17: #{tpu_custom_call.1} parent=1 // pred_fallthru
      _
    // Predicated region
    $region18: #{tpu_custom_call.1} parent=1 // pred_check
      _
    $region19: #{tpu_custom_call.1} parent=1 // pred_check_branch
      %41 = sbr.rel (0) target = $region21
    $region20: #{tpu_custom_call.1} parent=1 // pred_region
      %42 = dma.done [#allocation6], 512
    $region21: #{tpu_custom_call.1} parent=1 // pred_fallthru
      _
    %v43 = vld [vmem:[#allocation2] sm:$0xff]
    %v44 = vld [vmem:[#allocation2 + $0x8] sm:$0xff]
    %v45 = vld [vmem:[#allocation5] sm:$0xff]
    %v46 = vld [vmem:[#allocation5 + $0x8] sm:$0xff]
    %v47 = vld [vmem:[#allocation5 + $0x10] sm:$0xff]
    %v48 = vld [vmem:[#allocation5 + $0x18] sm:$0xff]
    %v49 = vld [vmem:[%s2] sm:$0x1]
    %v51 = vlaneseq
    %v52 = vshrl.u32 %v51, 7
    %v53 = vsub.s32 0, %v52
    %v54 = vrot.slane %v49, %v53
    %vm56 = vcmask 261120
    %v58 = vsel %vm56, %v43, 0
    %v61 = vsel %vm56, %v44, 0
    %63 = vmatprep.subr.mxu0 0.0
    %64 = vmatpush1.msra.mxu0 %v45
    %65 = vmatprep.subr.mxu0 0.0
    %66 = vmatpush1.msra.mxu0 %v46
    %67 = vmatprep.subr.mxu0 0.0
    %68 = vmatpush1.msra.mxu0 %v47
    %69 = vmatprep.subr.mxu0 0.0
    %70 = vmatpush1.msra.mxu0 %v48
    %71 = vmatprep.subr.mxu0 0.0
    %72 = vmatpush1.msra.mxu0 0.0
    %73 = vmatprep.subr.mxu0 0.0
    %74 = vmatpush1.msra.mxu0 0.0
    %75 = vmatprep.subr.mxu0 0.0
    %76 = vmatpush1.msra.mxu0 0.0
    %77 = vmatprep.subr.mxu0 0.0
    %78 = vmatpush1.msra.mxu0 0.0
    %79 = vmatprep.subr.mxu0 0.0
    %80 = vmatpush1.msra.mxu0 0.0
    %81 = vmatprep.subr.mxu0 0.0
    %82 = vmatpush1.msra.mxu0 0.0
    %83 = vmatprep.subr.mxu0 0.0
    %84 = vmatpush1.msra.mxu0 0.0
    %85 = vmatprep.subr.mxu0 0.0
    %86 = vmatpush1.msra.mxu0 0.0
    %87 = vmatprep.subr.mxu0 0.0
    %88 = vmatpush1.msra.mxu0 0.0
    %89 = vmatprep.subr.mxu0 0.0
    %90 = vmatpush1.msra.mxu0 0.0
    %91 = vmatprep.subr.mxu0 0.0
    %92 = vmatpush1.msra.mxu0 0.0
    %93 = vmatprep.subr.mxu0 0.0
    %94 = vmatpush1.msra.mxu0 0.0
    %95 = vmatprep.subr.mxu0 0.0
    %96 = vmatpush1.msra.mxu0 0.0
    %97 = vmatprep.subr.mxu0 0.0
    %98 = vmatpush1.msra.mxu0 0.0
    %99 = vmatprep.subr.mxu0 0.0
    %100 = vmatpush1.msra.mxu0 0.0
    %101 = vmatprep.subr.mxu0 0.0
    %102 = vmatpush1.msra.mxu0 0.0
    %103 = vmatprep.subr.mxu0 0.0
    %104 = vmatpush1.msra.mxu0 0.0
    %105 = vmatprep.subr.mxu0 0.0
    %106 = vmatpush1.msra.mxu0 0.0
    %107 = vmatprep.subr.mxu0 0.0
    %108 = vmatpush1.msra.mxu0 0.0
    %109 = vmatprep.subr.mxu0 0.0
    %110 = vmatpush1.msra.mxu0 0.0
    %111 = vmatprep.subr.mxu0 0.0
    %112 = vmatpush1.msra.mxu0 0.0
    %113 = vmatprep.subr.mxu0 0.0
    %114 = vmatpush1.msra.mxu0 0.0
    %115 = vmatprep.subr.mxu0 0.0
    %116 = vmatpush1.msra.mxu0 0.0
    %117 = vmatprep.subr.mxu0 0.0
    %118 = vmatpush1.msra.mxu0 0.0
    %119 = vmatprep.subr.mxu0 0.0
    %120 = vmatpush1.msra.mxu0 0.0
    %121 = vmatprep.subr.mxu0 0.0
    %122 = vmatpush1.msra.mxu0 0.0
    %123 = vmatprep.subr.mxu0 0.0
    %124 = vmatpush1.msra.mxu0 0.0
    %125 = vmatprep.subr.mxu0 0.0
    %126 = vmatpush1.msra.mxu0 0.0
    %127 = vmatprep.mubr.f32.mxu0 0.0
    %128 = vmatmul.mubr.f32.gmra.mrb[0].mxu0 %v58
    %v129 = vpop.f32.mrb[0].mxu0
    %v130 = vadd.f32 %v54, %v129
    %v131 = vpop.f32.mrb[0].mxu0
    %132 = vmatprep.mubr.f32.mxu0 0.0
    %133 = vmatmul.mubr.f32.gmra.mrb[0].mxu0 %v61
    %v134 = vpop.f32.mrb[0].mxu0
    %v135 = vadd.f32 %v54, %v134
    %v136 = vpop.f32.mrb[0].mxu0
    %137 = vdwg.mxu0
    %vm138 = vcmask 785408
    %139 = vst.msk [vmem:[#allocation7] sm:$0xff] %vm138, %v130
    %140 = vst.msk [vmem:[#allocation7 + $0x8] sm:$0xff] %vm138, %v135
    // Predicated region
    $region22: #{tpu_custom_call.1} parent=1 // pred_check
      _
    $region23: #{tpu_custom_call.1} parent=1 // pred_check_branch
      %142 = sbr.rel (0) target = $region25
    $region24: #{tpu_custom_call.1} parent=1 // pred_region
      %s144 = ssub.s32 256, 256
      %145 = vsyncadd [#allocation4], %s144
      %s146 = sshll.u32 [#allocation7], 4
      %s147 = int_to_ptr.vmem [resolvable:$true] %s146
      %152 = dma.vmem_to_hbm [thread:$0]  %s147, 256, %s3, [#allocation4], 128, 128, 8
    $region25: #{tpu_custom_call.1} parent=1 // pred_fallthru
      _
    // Predicated region
    $region26: #{tpu_custom_call.1} parent=1 // pred_check
      _
    $region27: #{tpu_custom_call.1} parent=1 // pred_check_branch
      %154 = sbr.rel (0) target = $region29
    $region28: #{tpu_custom_call.1} parent=1 // pred_region
      %155 = dma.done [#allocation4], 256
    $region29: #{tpu_custom_call.1} parent=1 // pred_fallthru
      _
    %156 = vsyncpa [#allocation3], 1
    %157 = vsyncpa [#allocation6], 1
    %158 = vsyncpa [#allocation4], 1

</llo_original>
